<compile_context>
chip_gen: v7x
topology: tpu7x:2x2x1
jax: 0.10.0
libtpu: 0.0.40
codegen_flags: <defaults>
</compile_context>

<pallas_src>
import functools
from collections import namedtuple

import jax
import jax.numpy as jnp
from jax.experimental import pallas as pl
from jax.experimental.pallas import tpu as pltpu

# -----------------------------------------------------------------------------
# Genotype (all skip_connect, normal cell), DARTS conventions.
# -----------------------------------------------------------------------------
Genotype = namedtuple("Genotype", "normal normal_concat reduce reduce_concat")
GENO = Genotype(
    normal=[("skip_connect", 0), ("skip_connect", 1),
            ("skip_connect", 0), ("skip_connect", 2),
            ("skip_connect", 1), ("skip_connect", 3),
            ("skip_connect", 2), ("skip_connect", 4)],
    normal_concat=list(range(2, 6)),
    reduce=[("skip_connect", 0), ("skip_connect", 1),
            ("skip_connect", 0), ("skip_connect", 2),
            ("skip_connect", 1), ("skip_connect", 3),
            ("skip_connect", 2), ("skip_connect", 4)],
    reduce_concat=list(range(2, 6)),
)
MULTIPLIER = len(GENO.normal_concat)  # 4


# -----------------------------------------------------------------------------
# Fused Pallas kernel: whole BottleneckBlock forward on one (C, tm) slab,
# transposed layout (channels on sublanes, spatial on lanes).
# -----------------------------------------------------------------------------
def _bottleneck_kernel(s0_ref, s1_ref, w_ref, b_ref, o_ref, *,
                       meta, num_layer, matmul_dtype):
    """refs:
      s0_ref (1, Cpp, tm)   s1_ref (1, Cp, tm)
      w_ref  (R, Cmax)  packed, row-stacked, BN+skip-coefficient folded weights
      b_ref  (B, 1)     packed per-output-channel biases
      o_ref  (1, Cout, tm)
    `meta` carries static per-stage descriptors (row offsets, chunk widths,
    bias offset, relu flag)."""

    def lin(chunks, d):
        """(optional ReLU) -> 1x1 conv as W^T @ X^T on the MXU -> +bias.

        `chunks` is a tuple of (c, tm) slabs; per-chunk folded weights live at
        static, 8-aligned row offsets of the packed weight slab."""
        acc = None
        for c, (r0, ck) in zip(chunks, d["rows"]):
            x = jnp.maximum(c, 0.0) if d["relu"] else c          # ReLU in f32
            x = x.astype(matmul_dtype)
            w = w_ref[r0:r0 + d["oc"], 0:ck].astype(matmul_dtype)
            y = jnp.dot(w, x, preferred_element_type=jnp.float32)  # MXU, f32 acc
            acc = y if acc is None else acc + y
        return acc + b_ref[d["b0"]:d["b0"] + d["oc"], :]          # lane broadcast

    s0 = (lin((s0_ref[0],), meta["down1"]),)   # down_1 (Conv1x1 + BN)
    s1 = (lin((s1_ref[0],), meta["down2"]),)   # down_2

    out = None
    for k in range(num_layer):
        p0 = lin(s0, meta["pre0"][k])          # preprocess0 (ReLU-Conv-BN)
        p1 = lin(s1, meta["pre1"][k])          # preprocess1
        # all-skip_connect DARTS cell output = concat([t, p0+t, 2t, 3t]);
        # the 1/1/2/3 coefficients are folded into the consumer weights on the
        # host, so the carried state is just the pair (t, u = p0 + t).
        t = p0 + p1
        out = (t, p0 + t)
        s0, s1 = s1, out

    o_ref[0] = lin(out, meta["up"]).astype(o_ref.dtype)   # up (Conv1x1 + BN)


# -----------------------------------------------------------------------------
# Host-side parameter packing (BN fold + skip-coefficient fold + single slab).
# -----------------------------------------------------------------------------
def _fold_bn(p):
    wT = (p["w"] * p["scale"][None, :]).T               # (Cout, Cin)
    b = p["bias"].reshape(-1, 1).astype(jnp.float32)    # (Cout, 1)
    return wT, b


def _pack_params(params, num_layer):
    """Pack all stage weights into ONE row-stacked f32 slab and all biases into
    ONE (B,1) slab; return static per-stage descriptors for the kernel."""
    blocks, biases = [], []
    meta = {"pre0": [], "pre1": []}
    row = 0
    boff = 0
    max_cols = 0

    def add_op(p, kind, relu):
        nonlocal row, boff, max_cols
        wT, b = _fold_bn(p)
        oc, ic = wT.shape
        assert oc % 8 == 0, f"output channels must be 8-aligned, got {oc}"
        if kind == "plain":
            chunk_ws = [wT]
        else:
            # Consumer of a cell output concat([t, p0+t, 2t, 3t]):
            #   (relu?)(concat) @ W == (relu?)(t) @ (W0+2W2+3W3) + (relu?)(u) @ W1
            assert ic % MULTIPLIER == 0
            cc = ic // MULTIPLIER
            assert cc % 8 == 0, f"chunk channels must be 8-aligned, got {cc}"
            chunk_ws = [wT[:, 0:cc] + 2.0 * wT[:, 2 * cc:3 * cc]
                        + 3.0 * wT[:, 3 * cc:4 * cc],
                        wT[:, cc:2 * cc]]
        rows = []
        for cw in chunk_ws:
            blocks.append(cw)
            rows.append((row, int(cw.shape[1])))
            row += int(cw.shape[0])
            max_cols = max(max_cols, int(cw.shape[1]))
        biases.append(b)
        d = dict(rows=tuple(rows), oc=int(oc), b0=boff, relu=relu)
        boff += int(oc)
        return d

    meta["down1"] = add_op(params["down_1"], "plain", relu=False)
    meta["down2"] = add_op(params["down_2"], "plain", relu=False)
    k0 = k1 = "plain"
    for cell in params["cells"]:
        meta["pre0"].append(add_op(cell["pre0"], k0, relu=True))
        meta["pre1"].append(add_op(cell["pre1"], k1, relu=True))
        k0, k1 = k1, "pair"
    meta["up"] = add_op(params["up"], k1, relu=False)

    w_slab = jnp.zeros((row, max_cols), jnp.float32)
    r = 0
    for cw in blocks:
        w_slab = w_slab.at[r:r + cw.shape[0], 0:cw.shape[1]].set(cw)
        r += int(cw.shape[0])
    b_slab = jnp.concatenate(biases, axis=0)             # (total_out_c, 1)
    return w_slab, b_slab, meta


def _pick_tile_m(hw, max_tile=1024):
    """Spatial (lane) tile: the full H*W plane when small (no pointless grid
    splits on 1-TC v5e/v6e), else the largest 128-multiple divisor <= max_tile
    (lane-dense, unmasked stores).  Falls back to the full dim (always legal)."""
    if hw <= max_tile:
        return hw
    for t in range(max_tile, 127, -128):
        if hw % t == 0:
            return t
    return hw


# -----------------------------------------------------------------------------
# Wrapper
# -----------------------------------------------------------------------------
def bottleneck_forward(params, s0, s1, drop_prob=0.0,
                       matmul_dtype=jnp.bfloat16):
    """Fused BottleneckBlock forward.  s0, s1 are NCHW float32 tensors."""
    del drop_prob  # TODO(synk): drop_path is a no-op for Identity ops / eval mode.
    N, Cpp, H, W = s0.shape
    Cp = s1.shape[1]
    HW = H * W
    num_layer = len(params["cells"])
    assert num_layer >= 1
    Cout = params["up"]["w"].shape[1]

    # Free view reshapes (contiguous NCHW) — no host-side transposes at all.
    s0_3d = s0.reshape(N, Cpp, HW)
    s1_3d = s1.reshape(N, Cp, HW)

    w_slab, b_slab, meta = _pack_params(params, num_layer)

    tm = _pick_tile_m(HW)
    grid = (N, HW // tm)   # batch axis gives >=2 parallel steps for v7x's 2 TCs

    kernel = functools.partial(_bottleneck_kernel, meta=meta,
                               num_layer=num_layer, matmul_dtype=matmul_dtype)

    out3d = pl.pallas_call(
        kernel,
        out_shape=jax.ShapeDtypeStruct((N, Cout, HW), jnp.float32),
        grid=grid,
        in_specs=[
            pl.BlockSpec((1, Cpp, tm), lambda n, j: (n, 0, j)),
            pl.BlockSpec((1, Cp, tm), lambda n, j: (n, 0, j)),
            pl.BlockSpec(w_slab.shape, lambda n, j: (0, 0)),
            pl.BlockSpec(b_slab.shape, lambda n, j: (0, 0)),
        ],
        out_specs=pl.BlockSpec((1, Cout, tm), lambda n, j: (n, 0, j)),
        compiler_params=pltpu.CompilerParams(
            dimension_semantics=("parallel", "parallel"),
            vmem_limit_bytes=32 * 1024 * 1024),
    )(s0_3d, s1_3d, w_slab, b_slab)

    return out3d.reshape(N, Cout, H, W)


# -----------------------------------------------------------------------------
# Parameter construction (deterministic, synthetic)
# -----------------------------------------------------------------------------
def _bn_params(key, c):
    kg, kb = jax.random.split(key)
    gamma = jax.random.uniform(kg, (c,), jnp.float32, 0.5, 1.5)
    beta = 0.1 * jax.random.normal(kb, (c,), jnp.float32)
    running_mean = jnp.zeros((c,), jnp.float32)
    running_var = jnp.ones((c,), jnp.float32)
    eps = 1e-5
    scale = gamma / jnp.sqrt(running_var + eps)
    bias = beta - running_mean * scale
    return scale, bias


def _conv_bn(key, cin, cout):
    kw, kbn = jax.random.split(key)
    w = jax.random.normal(kw, (cin, cout), jnp.float32) / jnp.sqrt(cin)
    scale, bias = _bn_params(kbn, cout)
    return {"w": w, "scale": scale, "bias": bias}


def make_bottleneck_params(key, num_layer, C_prev_prev, C_prev, C, expansion):
    keys = jax.random.split(key, 3 + 2 * num_layer)
    params = {
        "down_1": _conv_bn(keys[0], C_prev_prev, C_prev_prev // expansion),
        "down_2": _conv_bn(keys[1], C_prev, C_prev // expansion),
        "cells": [],
    }
    cpp, cp = C_prev_prev, C_prev  # mirrors the PyTorch constructor bookkeeping
    for li in range(num_layer):
        kc = keys[2 + 2 * li]
        k0, k1 = jax.random.split(kc)
        cell = {
            "pre0": _conv_bn(k0, cpp // expansion, C // expansion),
            "pre1": _conv_bn(k1, cp // expansion, C // expansion),
        }
        params["cells"].append(cell)
        cpp, cp = cp, C * MULTIPLIER
    params["up"] = _conv_bn(keys[-1], C // expansion * MULTIPLIER, C * MULTIPLIER)
    return params


# -----------------------------------------------------------------------------
# Pure-JAX reference (general node-chaining form, f32, NCHW) for correctness.
# -----------------------------------------------------------------------------
def _reference_forward(params, s0, s1):
    def conv_bn(x, p, relu=False):
        w = p["w"] * p["scale"][None, :]
        b = p["bias"]
        if relu:
            x = jnp.maximum(x, 0.0)
        return jnp.einsum("nchw,cd->ndhw", x, w) + b[None, :, None, None]

    s0 = conv_bn(s0, params["down_1"])
    s1 = conv_bn(s1, params["down_2"])
    out = None
    for cell in params["cells"]:
        p0 = conv_bn(s0, cell["pre0"], relu=True)
        p1 = conv_bn(s1, cell["pre1"], relu=True)
        states = [p0, p1]
        for i in range(len(GENO.normal) // 2):
            _, i1 = GENO.normal[2 * i]
            _, i2 = GENO.normal[2 * i + 1]
            states.append(states[i1] + states[i2])  # skip_connect == Identity
        out = jnp.concatenate([states[i] for i in GENO.normal_concat], axis=1)
        s0, s1 = s1, out
    return conv_bn(out, params["up"])


# -----------------------------------------------------------------------------
# Main
# -----------------------------------------------------------------------------
if __name__ == "__main__":
    # Small, self-consistent config: spatial plane H*W=256 is a lane-dense
    # multiple of 128; every channel count is a multiple of 8.
    N, H, W = 2, 16, 16
    C_prev_prev, C_prev, C = 16, 16, 16
    expansion = 2
    num_layer = 2
    # reduction=False, reduction_prev=False (normal cells only)

    key = jax.random.PRNGKey(0)
    kp, ks0, ks1 = jax.random.split(key, 3)

    params = make_bottleneck_params(kp, num_layer, C_prev_prev, C_prev, C,
                                    expansion)
    s0 = jax.random.normal(ks0, (N, C_prev_prev, H, W), jnp.float32)
    s1 = jax.random.normal(ks1, (N, C_prev, H, W), jnp.float32)

    ref = jax.block_until_ready(_reference_forward(params, s0, s1))
    expected_cout = C * MULTIPLIER  # 64

    # 1) f32-operand matmul path: tight check against the pure-JAX reference.
    out_f32 = jax.block_until_ready(
        bottleneck_forward(params, s0, s1, drop_prob=0.0,
                           matmul_dtype=jnp.float32))
    assert out_f32.shape == (N, expected_cout, H, W), out_f32.shape
    assert bool(jnp.all(jnp.isfinite(out_f32)))
    assert bool(jnp.allclose(out_f32, ref, atol=1e-3, rtol=1e-3)), \
        float(jnp.max(jnp.abs(out_f32 - ref)))

    # 2) bf16-operand matmul path (native MXU dtype on v6e/v7x), f32 accumulate.
    out_bf16 = jax.block_until_ready(
        bottleneck_forward(params, s0, s1, drop_prob=0.0,
                           matmul_dtype=jnp.bfloat16))
    assert out_bf16.shape == (N, expected_cout, H, W), out_bf16.shape
    assert bool(jnp.all(jnp.isfinite(out_bf16)))
    rel_err = float(jnp.linalg.norm(out_bf16 - ref) / jnp.linalg.norm(ref))
    assert rel_err < 5e-2, rel_err

    print("KERNEL_OK")
</pallas_src>

<mosaic_0001>
module attributes {stable_mosaic.version = 11 : i64} {
  func.func @_bottleneck_kernel(%arg0: i32, %arg1: i32, %arg2: memref<1x16x256xf32, #tpu.memory_space<vmem>>, %arg3: memref<1x16x256xf32, #tpu.memory_space<vmem>>, %arg4: memref<184x16xf32, #tpu.memory_space<vmem>>, %arg5: memref<112x1xf32, #tpu.memory_space<vmem>>, %arg6: memref<1x64x256xf32, #tpu.memory_space<vmem>>) attributes {dimension_semantics = [#tpu.dimension_semantics<parallel>, #tpu.dimension_semantics<parallel>], iteration_bounds = array<i64: 2, 1>, scalar_prefetch = 0 : i64, scratch_operands = 0 : i64, tpu.core_type = #tpu.core_type<tc>, window_params = [{transform_indices = @transform_0, window_bounds = array<i64: 1, 16, 256>}, {transform_indices = @transform_1, window_bounds = array<i64: 1, 16, 256>}, {pipeline_mode = #tpu.pipeline_mode<synchronous>, transform_indices = @transform_2, window_bounds = array<i64: 184, 16>}, {pipeline_mode = #tpu.pipeline_mode<synchronous>, transform_indices = @transform_3, window_bounds = array<i64: 112, 1>}, {transform_indices = @transform_4, window_bounds = array<i64: 1, 64, 256>}]} {
    %c0 = arith.constant 0 : index
    %c0_0 = arith.constant 0 : index
    %c0_1 = arith.constant 0 : index
    %0 = vector.load %arg2[%c0, %c0_0, %c0_1] : memref<1x16x256xf32, #tpu.memory_space<vmem>>, vector<1x16x256xf32>
    %1 = vector.shape_cast %0 : vector<1x16x256xf32> to vector<16x256xf32>
    %c0_2 = arith.constant 0 : index
    %c0_3 = arith.constant 0 : index
    %2 = vector.load %arg4[%c0_2, %c0_3] : memref<184x16xf32, #tpu.memory_space<vmem>>, vector<8x16xf32>
    %cst = arith.constant dense<0.000000e+00> : vector<8x256xf32>
    %3 = tpu.matmul %2, %1, %cst {dimension_numbers = #tpu.dot_dimension_numbers<[1], [0], [0], [1], [0, 0, 1, 1], [], []>} : vector<8x16xf32>, vector<16x256xf32>, vector<8x256xf32> -> vector<8x256xf32>
    %c0_4 = arith.constant 0 : index
    %c0_5 = arith.constant 0 : index
    %4 = vector.load %arg5[%c0_4, %c0_5] : memref<112x1xf32, #tpu.memory_space<vmem>>, vector<8x1xf32>
    %5 = vector.broadcast %4 : vector<8x1xf32> to vector<8x256xf32>
    %6 = arith.addf %3, %5 : vector<8x256xf32>
    %c0_6 = arith.constant 0 : index
    %c0_7 = arith.constant 0 : index
    %c0_8 = arith.constant 0 : index
    %7 = vector.load %arg3[%c0_6, %c0_7, %c0_8] : memref<1x16x256xf32, #tpu.memory_space<vmem>>, vector<1x16x256xf32>
    %8 = vector.shape_cast %7 : vector<1x16x256xf32> to vector<16x256xf32>
    %c8 = arith.constant 8 : index
    %c0_9 = arith.constant 0 : index
    %9 = vector.load %arg4[%c8, %c0_9] : memref<184x16xf32, #tpu.memory_space<vmem>>, vector<8x16xf32>
    %cst_10 = arith.constant dense<0.000000e+00> : vector<8x256xf32>
    %10 = tpu.matmul %9, %8, %cst_10 {dimension_numbers = #tpu.dot_dimension_numbers<[1], [0], [0], [1], [0, 0, 1, 1], [], []>} : vector<8x16xf32>, vector<16x256xf32>, vector<8x256xf32> -> vector<8x256xf32>
    %c8_11 = arith.constant 8 : index
    %c0_12 = arith.constant 0 : index
    %11 = vector.load %arg5[%c8_11, %c0_12] : memref<112x1xf32, #tpu.memory_space<vmem>>, vector<8x1xf32>
    %12 = vector.broadcast %11 : vector<8x1xf32> to vector<8x256xf32>
    %13 = arith.addf %10, %12 : vector<8x256xf32>
    %cst_13 = arith.constant 0.000000e+00 : f32
    %14 = vector.broadcast %cst_13 : f32 to vector<8x256xf32>
    %15 = arith.maximumf %6, %14 : vector<8x256xf32>
    %c16 = arith.constant 16 : index
    %c0_14 = arith.constant 0 : index
    %16 = vector.load %arg4[%c16, %c0_14] : memref<184x16xf32, #tpu.memory_space<vmem>>, vector<8x8xf32>
    %cst_15 = arith.constant dense<0.000000e+00> : vector<8x256xf32>
    %17 = tpu.matmul %16, %15, %cst_15 {dimension_numbers = #tpu.dot_dimension_numbers<[1], [0], [0], [1], [0, 0, 1, 1], [], []>} : vector<8x8xf32>, vector<8x256xf32>, vector<8x256xf32> -> vector<8x256xf32>
    %c16_16 = arith.constant 16 : index
    %c0_17 = arith.constant 0 : index
    %18 = vector.load %arg5[%c16_16, %c0_17] : memref<112x1xf32, #tpu.memory_space<vmem>>, vector<8x1xf32>
    %19 = vector.broadcast %18 : vector<8x1xf32> to vector<8x256xf32>
    %20 = arith.addf %17, %19 : vector<8x256xf32>
    %cst_18 = arith.constant 0.000000e+00 : f32
    %21 = vector.broadcast %cst_18 : f32 to vector<8x256xf32>
    %22 = arith.maximumf %13, %21 : vector<8x256xf32>
    %c24 = arith.constant 24 : index
    %c0_19 = arith.constant 0 : index
    %23 = vector.load %arg4[%c24, %c0_19] : memref<184x16xf32, #tpu.memory_space<vmem>>, vector<8x8xf32>
    %cst_20 = arith.constant dense<0.000000e+00> : vector<8x256xf32>
    %24 = tpu.matmul %23, %22, %cst_20 {dimension_numbers = #tpu.dot_dimension_numbers<[1], [0], [0], [1], [0, 0, 1, 1], [], []>} : vector<8x8xf32>, vector<8x256xf32>, vector<8x256xf32> -> vector<8x256xf32>
    %c24_21 = arith.constant 24 : index
    %c0_22 = arith.constant 0 : index
    %25 = vector.load %arg5[%c24_21, %c0_22] : memref<112x1xf32, #tpu.memory_space<vmem>>, vector<8x1xf32>
    %26 = vector.broadcast %25 : vector<8x1xf32> to vector<8x256xf32>
    %27 = arith.addf %24, %26 : vector<8x256xf32>
    %28 = arith.addf %20, %27 : vector<8x256xf32>
    %29 = arith.addf %20, %28 : vector<8x256xf32>
    %cst_23 = arith.constant 0.000000e+00 : f32
    %30 = vector.broadcast %cst_23 : f32 to vector<8x256xf32>
    %31 = arith.maximumf %13, %30 : vector<8x256xf32>
    %c32 = arith.constant 32 : index
    %c0_24 = arith.constant 0 : index
    %32 = vector.load %arg4[%c32, %c0_24] : memref<184x16xf32, #tpu.memory_space<vmem>>, vector<8x8xf32>
    %cst_25 = arith.constant dense<0.000000e+00> : vector<8x256xf32>
    %33 = tpu.matmul %32, %31, %cst_25 {dimension_numbers = #tpu.dot_dimension_numbers<[1], [0], [0], [1], [0, 0, 1, 1], [], []>} : vector<8x8xf32>, vector<8x256xf32>, vector<8x256xf32> -> vector<8x256xf32>
    %c32_26 = arith.constant 32 : index
    %c0_27 = arith.constant 0 : index
    %34 = vector.load %arg5[%c32_26, %c0_27] : memref<112x1xf32, #tpu.memory_space<vmem>>, vector<8x1xf32>
    %35 = vector.broadcast %34 : vector<8x1xf32> to vector<8x256xf32>
    %36 = arith.addf %33, %35 : vector<8x256xf32>
    %cst_28 = arith.constant 0.000000e+00 : f32
    %37 = vector.broadcast %cst_28 : f32 to vector<8x256xf32>
    %38 = arith.maximumf %28, %37 : vector<8x256xf32>
    %c40 = arith.constant 40 : index
    %c0_29 = arith.constant 0 : index
    %39 = vector.load %arg4[%c40, %c0_29] : memref<184x16xf32, #tpu.memory_space<vmem>>, vector<8x8xf32>
    %cst_30 = arith.constant dense<0.000000e+00> : vector<8x256xf32>
    %40 = tpu.matmul %39, %38, %cst_30 {dimension_numbers = #tpu.dot_dimension_numbers<[1], [0], [0], [1], [0, 0, 1, 1], [], []>} : vector<8x8xf32>, vector<8x256xf32>, vector<8x256xf32> -> vector<8x256xf32>
    %cst_31 = arith.constant 0.000000e+00 : f32
    %41 = vector.broadcast %cst_31 : f32 to vector<8x256xf32>
    %42 = arith.maximumf %29, %41 : vector<8x256xf32>
    %c48 = arith.constant 48 : index
    %c0_32 = arith.constant 0 : index
    %43 = vector.load %arg4[%c48, %c0_32] : memref<184x16xf32, #tpu.memory_space<vmem>>, vector<8x8xf32>
    %cst_33 = arith.constant dense<0.000000e+00> : vector<8x256xf32>
    %44 = tpu.matmul %43, %42, %cst_33 {dimension_numbers = #tpu.dot_dimension_numbers<[1], [0], [0], [1], [0, 0, 1, 1], [], []>} : vector<8x8xf32>, vector<8x256xf32>, vector<8x256xf32> -> vector<8x256xf32>
    %45 = arith.addf %40, %44 : vector<8x256xf32>
    %c40_34 = arith.constant 40 : index
    %c0_35 = arith.constant 0 : index
    %46 = vector.load %arg5[%c40_34, %c0_35] : memref<112x1xf32, #tpu.memory_space<vmem>>, vector<8x1xf32>
    %47 = vector.broadcast %46 : vector<8x1xf32> to vector<8x256xf32>
    %48 = arith.addf %45, %47 : vector<8x256xf32>
    %49 = arith.addf %36, %48 : vector<8x256xf32>
    %50 = arith.addf %36, %49 : vector<8x256xf32>
    %c56 = arith.constant 56 : index
    %c0_36 = arith.constant 0 : index
    %51 = vector.load %arg4[%c56, %c0_36] : memref<184x16xf32, #tpu.memory_space<vmem>>, vector<64x8xf32>
    %cst_37 = arith.constant dense<0.000000e+00> : vector<64x256xf32>
    %52 = tpu.matmul %51, %49, %cst_37 {dimension_numbers = #tpu.dot_dimension_numbers<[1], [0], [0], [1], [0, 0, 1, 1], [], []>} : vector<64x8xf32>, vector<8x256xf32>, vector<64x256xf32> -> vector<64x256xf32>
    %c120 = arith.constant 120 : index
    %c0_38 = arith.constant 0 : index
    %53 = vector.load %arg4[%c120, %c0_38] : memref<184x16xf32, #tpu.memory_space<vmem>>, vector<64x8xf32>
    %cst_39 = arith.constant dense<0.000000e+00> : vector<64x256xf32>
    %54 = tpu.matmul %53, %50, %cst_39 {dimension_numbers = #tpu.dot_dimension_numbers<[1], [0], [0], [1], [0, 0, 1, 1], [], []>} : vector<64x8xf32>, vector<8x256xf32>, vector<64x256xf32> -> vector<64x256xf32>
    %55 = arith.addf %52, %54 : vector<64x256xf32>
    %c48_40 = arith.constant 48 : index
    %c0_41 = arith.constant 0 : index
    %56 = vector.load %arg5[%c48_40, %c0_41] : memref<112x1xf32, #tpu.memory_space<vmem>>, vector<64x1xf32>
    %57 = vector.broadcast %56 : vector<64x1xf32> to vector<64x256xf32>
    %58 = arith.addf %55, %57 : vector<64x256xf32>
    %c0_42 = arith.constant 0 : index
    %c0_43 = arith.constant 0 : index
    %c0_44 = arith.constant 0 : index
    %59 = vector.load %arg6[%c0_42, %c0_43, %c0_44] : memref<1x64x256xf32, #tpu.memory_space<vmem>>, vector<1x64x256xf32>
    %60 = vector.shape_cast %59 : vector<1x64x256xf32> to vector<64x256xf32>
    %61 = vector.shape_cast %58 : vector<64x256xf32> to vector<1x64x256xf32>
    tpu.vector_store %arg6[%c0_42, %c0_43, %c0_44], %61 {strides = array<i32>} : memref<1x64x256xf32, #tpu.memory_space<vmem>>, vector<1x64x256xf32>,
    return
  }
  func.func @transform_0(%arg0: i32, %arg1: i32) -> (i32, i32, i32) {
    %c0_i32 = arith.constant 0 : i32
    %c0_i32_0 = arith.constant 0 : i32
    return %arg0, %c0_i32, %arg1 : i32, i32, i32
  }
  func.func @transform_1(%arg0: i32, %arg1: i32) -> (i32, i32, i32) {
    %c0_i32 = arith.constant 0 : i32
    %c0_i32_0 = arith.constant 0 : i32
    return %arg0, %c0_i32, %arg1 : i32, i32, i32
  }
  func.func @transform_2(%arg0: i32, %arg1: i32) -> (i32, i32) {
    %c0_i32 = arith.constant 0 : i32
    %c0_i32_0 = arith.constant 0 : i32
    %c0_i32_1 = arith.constant 0 : i32
    return %c0_i32, %c0_i32_0 : i32, i32
  }
  func.func @transform_3(%arg0: i32, %arg1: i32) -> (i32, i32) {
    %c0_i32 = arith.constant 0 : i32
    %c0_i32_0 = arith.constant 0 : i32
    %c0_i32_1 = arith.constant 0 : i32
    return %c0_i32, %c0_i32_0 : i32, i32
  }
  func.func @transform_4(%arg0: i32, %arg1: i32) -> (i32, i32, i32) {
    %c0_i32 = arith.constant 0 : i32
    %c0_i32_0 = arith.constant 0 : i32
    return %arg0, %c0_i32, %arg1 : i32, i32, i32
  }
}

</mosaic_0001>

<llo_original>
// kernel: tpu_custom_call.1
$region0: #{tpu_custom_call.1}
  #allocation0 [shape = 'u32[]', space=smem, size = 0x4, offset = 0x4, fixed_abs, tag = 'smem constant byte address 0x4 - core index']
  #allocation1 [shape = 'u32[144,128]{1,0:T(1,128)}', space=vmem, size = 0x12000, scoped, tag = 'internal scratch']
  %s0 = inlined_call_operand.vmem [shape: f32[2,16,256], index: 0, kind: input, shape index: {}]
  %s1 = inlined_call_operand.vmem [shape: f32[2,16,256], index: 1, kind: input, shape index: {}]
  %s2 = inlined_call_operand.vmem [shape: f32[184,16], index: 2, kind: input, shape index: {}]
  %s3 = inlined_call_operand.vmem [shape: f32[112,1], index: 3, kind: input, shape index: {}]
  %s4 = inlined_call_operand.hbm [shape: f32[2,64,256], index: 4, kind: output, shape index: {}]
  %s5 = sld [smem:[#allocation0]]
  $region49: #{tpu_custom_call.1} parent=0
    _
  %s7 = ssub.s32 1, %s5
  %s8 = scalar_select 0, %s7, %s5
  $region1: #{tpu_custom_call.1} parent=0
    #allocation2 [shape = 'u8[131072]{0}', space=vmem, size = 0x20000, scoped, tag = 'output window, operand 0']
    #allocation3 [shape = 's32[2]{0}', space=sflag, size = 0x8, scoped, tag = 'scoped memory for tpu_custom_call.1']
    %9 = vsyncpa [#allocation3], 0
    %s10 = scalar_lea.sflag [#allocation3], 1
    %11 = vsyncpa %s10, 0
    loop: start=0, step=1, limit=4
    $region2: #{tpu_custom_call.1} parent=1 // loop_pre_header
      _
    $region3: #{tpu_custom_call.1} parent=1 // loop_header
      %s13 = sphi 0, %s17
      %p14 = scmp.ge.s32.totalorder %s13, 4
      %s20 = sphi 0, %s32
      %s21 = sphi 0, %s28
      %s22 = sphi 0, %s20
      %s23 = sphi 0, %s21
      %s24 = sphi 0, %s22
      %s25 = sphi 0, %s23
      %s37 = sphi 0, %s39
      %s40 = sphi 0, %s37
      %s41 = sphi 0, %s40
      %s57 = sphi 0, %s41
      %s65 = sphi 0, %s67
      %s68 = sphi 0, %s65
      %s69 = sphi 0, %s68
      %s85 = sphi 0, %s69
      %s89 = sphi 0, %s89
      %s91 = sphi 0, %s89
      %s92 = sphi 0, %s91
      %s106 = sphi 0, %s92
      %s110 = sphi 0, %s110
      %s112 = sphi 0, %s110
      %s113 = sphi 0, %s112
      %s127 = sphi 0, %s113
      %s135 = sphi 0, %s137
      %s138 = sphi 0, %s135
      %s139 = sphi 0, %s138
      %s155 = sphi 0, %s139
    $region4: #{tpu_custom_call.1} parent=1 // loop_header_branch
      %16 = sbr.rel (%p14) target = $region8
    $region5: #{tpu_custom_call.1} parent=1 // loop_body
      %s18 = ssub.s32 %s13, 1
      %s19 = ssub.s32 %s13, 2
      %s26 = sadd.s32 1, %s21
      %p27 = scmp.ge.s32.totalorder %s26, 1
      %s28 = scalar_select %p27, 0, %s26
      %s29 = sadd.s32 1, %s20
      %s30 = scalar_select %p27, %s29, %s20
      %p31 = scmp.ge.s32.totalorder %s30, 2
      %s32 = scalar_select %p31, 0, %s30
      %s33 = ssub.s32 %s20, %s32
      %s34 = ssub.s32 %s21, %s28
      %s35 = sor.u32 %s33, %s34
      %p36 = scmp.eq.s32.totalorder %s35, 0
      %s38 = sadd.s32 %s37, 1
      %s39 = scalar_select %p36, %s37, %s38
      %p42 = pneg %p36
      %p43 = scmp.eq.s32.totalorder %s13, 1
      %p44 = por %p42, %p43
      %p45 = scmp.ne.s32.totalorder %s37, %s40
      %p46 = scmp.eq.s32.totalorder %s13, 0
      %p47 = por %p45, %p46
      %p48 = scmp.ne.s32.totalorder %s37, %s40
      %p49 = scmp.eq.s32.totalorder %s18, 1
      %p50 = por %p48, %p49
      %p51 = scmp.ne.s32.totalorder %s40, %s41
      %p52 = scmp.eq.s32.totalorder %s18, 0
      %p53 = por %p51, %p52
      %p54 = scmp.ne.s32.totalorder %s40, %s41
      %p55 = scmp.eq.s32.totalorder %s19, 1
      %p56 = por %p54, %p55
      %p58 = scmp.ne.s32.totalorder %s41, %s57
      %p59 = scmp.eq.s32.totalorder %s19, 0
      %p60 = por %p58, %p59
      %s61 = ssub.s32 %s20, %s32
      %s62 = ssub.s32 %s21, %s28
      %s63 = sor.u32 %s61, %s62
      %p64 = scmp.eq.s32.totalorder %s63, 0
      %s66 = sadd.s32 %s65, 1
      %s67 = scalar_select %p64, %s65, %s66
      %p70 = pneg %p64
      %p71 = scmp.eq.s32.totalorder %s13, 1
      %p72 = por %p70, %p71
      %p73 = scmp.ne.s32.totalorder %s65, %s68
      %p74 = scmp.eq.s32.totalorder %s13, 0
      %p75 = por %p73, %p74
      %p76 = scmp.ne.s32.totalorder %s65, %s68
      %p77 = scmp.eq.s32.totalorder %s18, 1
      %p78 = por %p76, %p77
      %p79 = scmp.ne.s32.totalorder %s68, %s69
      %p80 = scmp.eq.s32.totalorder %s18, 0
      %p81 = por %p79, %p80
      %p82 = scmp.ne.s32.totalorder %s68, %s69
      %p83 = scmp.eq.s32.totalorder %s19, 1
      %p84 = por %p82, %p83
      %p86 = scmp.ne.s32.totalorder %s69, %s85
      %p87 = scmp.eq.s32.totalorder %s19, 0
      %p88 = por %p86, %p87
      %s90 = sadd.s32 %s89, 1
      %p93 = scmp.eq.s32.totalorder %s13, 1
      %p94 = scmp.ne.s32.totalorder %s89, %s91
      %p95 = scmp.eq.s32.totalorder %s13, 0
      %p96 = por %p94, %p95
      %p97 = scmp.ne.s32.totalorder %s89, %s91
      %p98 = scmp.eq.s32.totalorder %s18, 1
      %p99 = por %p97, %p98
      %p100 = scmp.ne.s32.totalorder %s91, %s92
      %p101 = scmp.eq.s32.totalorder %s18, 0
      %p102 = por %p100, %p101
      %p103 = scmp.ne.s32.totalorder %s91, %s92
      %p104 = scmp.eq.s32.totalorder %s19, 1
      %p105 = por %p103, %p104
      %p107 = scmp.ne.s32.totalorder %s92, %s106
      %p108 = scmp.eq.s32.totalorder %s19, 0
      %p109 = por %p107, %p108
      %s111 = sadd.s32 %s110, 1
      %p114 = scmp.eq.s32.totalorder %s13, 1
      %p115 = scmp.ne.s32.totalorder %s110, %s112
      %p116 = scmp.eq.s32.totalorder %s13, 0
      %p117 = por %p115, %p116
      %p118 = scmp.ne.s32.totalorder %s110, %s112
      %p119 = scmp.eq.s32.totalorder %s18, 1
      %p120 = por %p118, %p119
      %p121 = scmp.ne.s32.totalorder %s112, %s113
      %p122 = scmp.eq.s32.totalorder %s18, 0
      %p123 = por %p121, %p122
      %p124 = scmp.ne.s32.totalorder %s112, %s113
      %p125 = scmp.eq.s32.totalorder %s19, 1
      %p126 = por %p124, %p125
      %p128 = scmp.ne.s32.totalorder %s113, %s127
      %p129 = scmp.eq.s32.totalorder %s19, 0
      %p130 = por %p128, %p129
      %s131 = ssub.s32 %s20, %s32
      %s132 = ssub.s32 %s21, %s28
      %s133 = sor.u32 %s131, %s132
      %p134 = scmp.eq.s32.totalorder %s133, 0
      %s136 = sadd.s32 %s135, 1
      %s137 = scalar_select %p134, %s135, %s136
      %p140 = pneg %p134
      %p141 = scmp.eq.s32.totalorder %s13, 1
      %p142 = por %p140, %p141
      %p143 = scmp.ne.s32.totalorder %s135, %s138
      %p144 = scmp.eq.s32.totalorder %s13, 0
      %p145 = por %p143, %p144
      %p146 = scmp.ne.s32.totalorder %s135, %s138
      %p147 = scmp.eq.s32.totalorder %s18, 1
      %p148 = por %p146, %p147
      %p149 = scmp.ne.s32.totalorder %s138, %s139
      %p150 = scmp.eq.s32.totalorder %s18, 0
      %p151 = por %p149, %p150
      %p152 = scmp.ne.s32.totalorder %s138, %s139
      %p153 = scmp.eq.s32.totalorder %s19, 1
      %p154 = por %p152, %p153
      %p156 = scmp.ne.s32.totalorder %s139, %s155
      %p157 = scmp.eq.s32.totalorder %s19, 0
      %p158 = por %p156, %p157
      %p159 = scmp.le.s32.totalorder 1, %s13
      %p160 = scmp.lt.s32.totalorder %s13, 3
      %p161 = pnand %p159, %p160
      %p162 = pneg %p161
      // Predicated region
      $region9: #{tpu_custom_call.1} parent=5 // pred_check
        _
      $region10: #{tpu_custom_call.1} parent=5 // pred_check_branch
        %164 = sbr.rel (%p161) target = $region12
      $region11: #{tpu_custom_call.1} parent=5 // pred_region
        %s165 = ssub.s32 %s13, 1
        // Predicated region
        $region13: #{tpu_custom_call.1} parent=11 // pred_check
          %p166 = pneg %p102
        $region14: #{tpu_custom_call.1} parent=11 // pred_check_branch
          %168 = sbr.rel (%p166) target = $region16
        $region15: #{tpu_custom_call.1} parent=11 // pred_region
          _
        $region16: #{tpu_custom_call.1} parent=11 // pred_fallthru
          _
        // Predicated region
        $region17: #{tpu_custom_call.1} parent=11 // pred_check
          %p169 = pneg %p123
        $region18: #{tpu_custom_call.1} parent=11 // pred_check_branch
          %171 = sbr.rel (%p169) target = $region20
        $region19: #{tpu_custom_call.1} parent=11 // pred_region
          _
        $region20: #{tpu_custom_call.1} parent=11 // pred_fallthru
          _
      $region12: #{tpu_custom_call.1} parent=5 // pred_fallthru
        _
      %p172 = scmp.lt.s32.totalorder %s13, 2
      // Predicated region
      $region21: #{tpu_custom_call.1} parent=5 // pred_check
        %p173 = pneg %p172
      $region22: #{tpu_custom_call.1} parent=5 // pred_check_branch
        %175 = sbr.rel (%p173) target = $region24
      $region23: #{tpu_custom_call.1} parent=5 // pred_region
        // Predicated region
        $region25: #{tpu_custom_call.1} parent=23 // pred_check
          %p176 = pneg %p47
        $region26: #{tpu_custom_call.1} parent=23 // pred_check_branch
          %178 = sbr.rel (%p176) target = $region28
        $region27: #{tpu_custom_call.1} parent=23 // pred_region
          %s179 = smul.u32 2, %s21
          %p180 = scmp.lt.s32.totalorder %s20, 1
          %s181 = scalar_select %p180, %s20, 1
          %p182 = scmp.lt.s32.totalorder %s179, 1
          %s183 = scalar_select %p182, %s179, 1
          %s184 = smul.addr %s181, 4
          %s185 = sadd.s32 %s183, %s184
          %s186 = smul.addr %s185, 8
          %s187 = scalar_lea.vmem %s0, %s186
          %s188 = smul.u32 2, %s21
        $region28: #{tpu_custom_call.1} parent=23 // pred_fallthru
          _
        // Predicated region
        $region29: #{tpu_custom_call.1} parent=23 // pred_check
          %p189 = pneg %p75
        $region30: #{tpu_custom_call.1} parent=23 // pred_check_branch
          %191 = sbr.rel (%p189) target = $region32
        $region31: #{tpu_custom_call.1} parent=23 // pred_region
          %s192 = smul.u32 2, %s21
          %p193 = scmp.lt.s32.totalorder %s20, 1
          %s194 = scalar_select %p193, %s20, 1
          %p195 = scmp.lt.s32.totalorder %s192, 1
          %s196 = scalar_select %p195, %s192, 1
          %s197 = smul.addr %s194, 4
          %s198 = sadd.s32 %s196, %s197
          %s199 = smul.addr %s198, 8
          %s200 = scalar_lea.vmem %s1, %s199
          %s201 = smul.u32 2, %s21
        $region32: #{tpu_custom_call.1} parent=23 // pred_fallthru
          _
      $region24: #{tpu_custom_call.1} parent=5 // pred_fallthru
        _
      %p202 = scmp.le.s32.totalorder 1, %s13
      %p203 = scmp.lt.s32.totalorder %s13, 3
      %p204 = pnand %p202, %p203
      %p205 = pneg %p204
      // Predicated region
      $region33: #{tpu_custom_call.1} parent=5 // pred_check
        _
      $region34: #{tpu_custom_call.1} parent=5 // pred_check_branch
        %207 = sbr.rel (%p204) target = $region36
      $region35: #{tpu_custom_call.1} parent=5 // pred_region
        %s208 = ssub.s32 %s13, 1
        %s209 = smul.u32 2, %s23
        %p210 = scmp.lt.s32.totalorder %s22, 1
        %s211 = scalar_select %p210, %s22, 1
        %p212 = scmp.lt.s32.totalorder %s209, 1
        %s213 = scalar_select %p212, %s209, 1
        %s214 = smul.addr %s211, 4
        %s215 = sadd.s32 %s213, %s214
        %s216 = smul.addr %s215, 8
        %s217 = scalar_lea.vmem %s0, %s216
        %p218 = pneg %p53
        %p219 = pneg %p50
        %s220 = smul.u32 2, %s23
        %p221 = scmp.lt.s32.totalorder %s22, 1
        %s222 = scalar_select %p221, %s22, 1
        %p223 = scmp.lt.s32.totalorder %s220, 1
        %s224 = scalar_select %p223, %s220, 1
        %s225 = smul.addr %s222, 4
        %s226 = sadd.s32 %s224, %s225
        %s227 = smul.addr %s226, 8
        %s228 = scalar_lea.vmem %s1, %s227
        %p229 = pneg %p81
        %p230 = pneg %p78
        %p231 = pneg %p102
        %p232 = pneg %p99
        %p233 = pneg %p123
        %p234 = pneg %p120
        %p235 = pneg %p151
        %p236 = pneg %p148
        %s237 = sand.u32 %s138, 1
        %s238 = scalar_lea.sflag [#allocation3], %s237
        %s239 = sand.u32 %s138, 1
        %s240 = smul.addr %s239, 128
        %s241 = scalar_lea.vmem [#allocation2], %s240
        %s242 = smul.u32 2, %s23
        %p243 = scmp.lt.s32.totalorder %s22, 1
        %s244 = scalar_select %p243, %s22, 1
        %p245 = scmp.lt.s32.totalorder %s242, 1
        %s246 = scalar_select %p245, %s242, 1
        %s247 = smul.addr %s244, 4
        %s248 = sadd.s32 %s246, %s247
        %s249 = smul.addr %s248, 8
        %s250 = scalar_lea.vmem %s0, %s249
        %s251 = smul.u32 2, %s23
        %s252 = smul.u32 2, %s23
        %p253 = scmp.lt.s32.totalorder %s22, 1
        %s254 = scalar_select %p253, %s22, 1
        %p255 = scmp.lt.s32.totalorder %s252, 1
        %s256 = scalar_select %p255, %s252, 1
        %s257 = smul.addr %s254, 4
        %s258 = sadd.s32 %s256, %s257
        %s259 = smul.addr %s258, 8
        %s260 = scalar_lea.vmem %s1, %s259
        %s261 = smul.u32 2, %s23
        %s262 = smul.u32 2, %s23
        %v263 = vld [vmem:[%s250] sm:$0xff]
        %v264 = vld [vmem:[%s250 + $0x8] sm:$0xff]
        %v265 = vld [vmem:[%s250 + $0x10] sm:$0xff]
        %v266 = vld [vmem:[%s250 + $0x18] sm:$0xff]
        %v267 = vld [vmem:[%s2] sm:$0xff]
        %v268 = vld [vmem:[%s3] sm:$0xff]
        %270 = vset.pattern.permute.xlu0 0
        %271 = vperm.xlu0 %270, %v268
        %v272 = vpop.permute.xlu0 %271
        %vm274 = vcmask 130048
        %v276 = vsel %vm274, %v267, 0
        %278 = vmatprep.subr.mxu0 %v264
        %279 = vmatpush1.msra.mxu0 %v263
        %280 = vmatprep.subr.mxu0 %v266
        %281 = vmatpush1.msra.mxu0 %v265
        %282 = vmatprep.subr.mxu0 0.0
        %283 = vmatpush1.msra.mxu0 0.0
        %284 = vmatprep.subr.mxu0 0.0
        %285 = vmatpush1.msra.mxu0 0.0
        %286 = vmatprep.subr.mxu0 0.0
        %287 = vmatpush1.msra.mxu0 0.0
        %288 = vmatprep.subr.mxu0 0.0
        %289 = vmatpush1.msra.mxu0 0.0
        %290 = vmatprep.subr.mxu0 0.0
        %291 = vmatpush1.msra.mxu0 0.0
        %292 = vmatprep.subr.mxu0 0.0
        %293 = vmatpush1.msra.mxu0 0.0
        %294 = vmatprep.subr.mxu0 0.0
        %295 = vmatpush1.msra.mxu0 0.0
        %296 = vmatprep.subr.mxu0 0.0
        %297 = vmatpush1.msra.mxu0 0.0
        %298 = vmatprep.subr.mxu0 0.0
        %299 = vmatpush1.msra.mxu0 0.0
        %300 = vmatprep.subr.mxu0 0.0
        %301 = vmatpush1.msra.mxu0 0.0
        %302 = vmatprep.subr.mxu0 0.0
        %303 = vmatpush1.msra.mxu0 0.0
        %304 = vmatprep.subr.mxu0 0.0
        %305 = vmatpush1.msra.mxu0 0.0
        %306 = vmatprep.subr.mxu0 0.0
        %307 = vmatpush1.msra.mxu0 0.0
        %308 = vmatprep.subr.mxu0 0.0
        %309 = vmatpush1.msra.mxu0 0.0
        %310 = vmatprep.subr.mxu0 0.0
        %311 = vmatpush1.msra.mxu0 0.0
        %312 = vmatprep.subr.mxu0 0.0
        %313 = vmatpush1.msra.mxu0 0.0
        %314 = vmatprep.subr.mxu0 0.0
        %315 = vmatpush1.msra.mxu0 0.0
        %316 = vmatprep.subr.mxu0 0.0
        %317 = vmatpush1.msra.mxu0 0.0
        %318 = vmatprep.subr.mxu0 0.0
        %319 = vmatpush1.msra.mxu0 0.0
        %320 = vmatprep.subr.mxu0 0.0
        %321 = vmatpush1.msra.mxu0 0.0
        %322 = vmatprep.subr.mxu0 0.0
        %323 = vmatpush1.msra.mxu0 0.0
        %324 = vmatprep.subr.mxu0 0.0
        %325 = vmatpush1.msra.mxu0 0.0
        %326 = vmatprep.subr.mxu0 0.0
        %327 = vmatpush1.msra.mxu0 0.0
        %328 = vmatprep.subr.mxu0 0.0
        %329 = vmatpush1.msra.mxu0 0.0
        %330 = vmatprep.subr.mxu0 0.0
        %331 = vmatpush1.msra.mxu0 0.0
        %332 = vmatprep.subr.mxu0 0.0
        %333 = vmatpush1.msra.mxu0 0.0
        %334 = vmatprep.subr.mxu0 0.0
        %335 = vmatpush1.msra.mxu0 0.0
        %336 = vmatprep.subr.mxu0 0.0
        %337 = vmatpush1.msra.mxu0 0.0
        %338 = vmatprep.subr.mxu0 0.0
        %339 = vmatpush1.msra.mxu0 0.0
        %340 = vmatprep.subr.mxu0 0.0
        %341 = vmatpush1.msra.mxu0 0.0
        %342 = vmatprep.mubr.f32.mxu0 0.0
        %343 = vmatmul.mubr.f32.gmra.mrb[0].mxu0 %v276
        %v344 = vpop.f32.mrb[0].mxu0
        %v345 = vadd.f32 %v272, %v344
        %v346 = vpop.f32.mrb[0].mxu0
        %v347 = vadd.f32 %v272, %v346
        %348 = vdwg.mxu0
        %v349 = vld [vmem:[%s260] sm:$0xff]
        %v350 = vld [vmem:[%s260 + $0x8] sm:$0xff]
        %v351 = vld [vmem:[%s260 + $0x10] sm:$0xff]
        %v352 = vld [vmem:[%s260 + $0x18] sm:$0xff]
        %v353 = vld [vmem:[%s2 + $0x8] sm:$0xff]
        %v354 = vld [vmem:[%s3 + $0x8] sm:$0xff]
        %356 = vset.pattern.permute.xlu0 0
        %357 = vperm.xlu0 %356, %v354
        %v358 = vpop.permute.xlu0 %357
        %v361 = vsel %vm274, %v353, 0
        %363 = vmatprep.subr.mxu0 %v350
        %364 = vmatpush1.msra.mxu0 %v349
        %365 = vmatprep.subr.mxu0 %v352
        %366 = vmatpush1.msra.mxu0 %v351
        %367 = vmatprep.subr.mxu0 0.0
        %368 = vmatpush1.msra.mxu0 0.0
        %369 = vmatprep.subr.mxu0 0.0
        %370 = vmatpush1.msra.mxu0 0.0
        %371 = vmatprep.subr.mxu0 0.0
        %372 = vmatpush1.msra.mxu0 0.0
        %373 = vmatprep.subr.mxu0 0.0
        %374 = vmatpush1.msra.mxu0 0.0
        %375 = vmatprep.subr.mxu0 0.0
        %376 = vmatpush1.msra.mxu0 0.0
        %377 = vmatprep.subr.mxu0 0.0
        %378 = vmatpush1.msra.mxu0 0.0
        %379 = vmatprep.subr.mxu0 0.0
        %380 = vmatpush1.msra.mxu0 0.0
        %381 = vmatprep.subr.mxu0 0.0
        %382 = vmatpush1.msra.mxu0 0.0
        %383 = vmatprep.subr.mxu0 0.0
        %384 = vmatpush1.msra.mxu0 0.0
        %385 = vmatprep.subr.mxu0 0.0
        %386 = vmatpush1.msra.mxu0 0.0
        %387 = vmatprep.subr.mxu0 0.0
        %388 = vmatpush1.msra.mxu0 0.0
        %389 = vmatprep.subr.mxu0 0.0
        %390 = vmatpush1.msra.mxu0 0.0
        %391 = vmatprep.subr.mxu0 0.0
        %392 = vmatpush1.msra.mxu0 0.0
        %393 = vmatprep.subr.mxu0 0.0
        %394 = vmatpush1.msra.mxu0 0.0
        %395 = vmatprep.subr.mxu0 0.0
        %396 = vmatpush1.msra.mxu0 0.0
        %397 = vmatprep.subr.mxu0 0.0
        %398 = vmatpush1.msra.mxu0 0.0
        %399 = vmatprep.subr.mxu0 0.0
        %400 = vmatpush1.msra.mxu0 0.0
        %401 = vmatprep.subr.mxu0 0.0
        %402 = vmatpush1.msra.mxu0 0.0
        %403 = vmatprep.subr.mxu0 0.0
        %404 = vmatpush1.msra.mxu0 0.0
        %405 = vmatprep.subr.mxu0 0.0
        %406 = vmatpush1.msra.mxu0 0.0
        %407 = vmatprep.subr.mxu0 0.0
        %408 = vmatpush1.msra.mxu0 0.0
        %409 = vmatprep.subr.mxu0 0.0
        %410 = vmatpush1.msra.mxu0 0.0
        %411 = vmatprep.subr.mxu0 0.0
        %412 = vmatpush1.msra.mxu0 0.0
        %413 = vmatprep.subr.mxu0 0.0
        %414 = vmatpush1.msra.mxu0 0.0
        %415 = vmatprep.subr.mxu0 0.0
        %416 = vmatpush1.msra.mxu0 0.0
        %417 = vmatprep.subr.mxu0 0.0
        %418 = vmatpush1.msra.mxu0 0.0
        %419 = vmatprep.subr.mxu0 0.0
        %420 = vmatpush1.msra.mxu0 0.0
        %421 = vmatprep.subr.mxu0 0.0
        %422 = vmatpush1.msra.mxu0 0.0
        %423 = vmatprep.subr.mxu0 0.0
        %424 = vmatpush1.msra.mxu0 0.0
        %425 = vmatprep.subr.mxu0 0.0
        %426 = vmatpush1.msra.mxu0 0.0
        %427 = vmatprep.mubr.f32.mxu0 0.0
        %428 = vmatmul.mubr.f32.gmra.mrb[0].mxu0 %v361
        %v429 = vpop.f32.mrb[0].mxu0
        %v430 = vadd.f32 %v358, %v429
        %v431 = vpop.f32.mrb[0].mxu0
        %v432 = vadd.f32 %v358, %v431
        %433 = vdwg.mxu0
        %v434 = vmax.f32 %v345, 0.0
        %v435 = vmax.f32 %v347, 0.0
        %v436 = vld [vmem:[%s2 + $0x10] sm:$0xff]
        %v437 = vld [vmem:[%s3 + $0x10] sm:$0xff]
        %439 = vset.pattern.permute.xlu0 0
        %440 = vperm.xlu0 %439, %v437
        %v441 = vpop.permute.xlu0 %440
        %vm443 = vcmask 64512
        %v445 = vsel %vm443, %v436, 0
        %447 = vmatprep.subr.mxu0 %v435
        %448 = vmatpush1.msra.mxu0 %v434
        %449 = vmatprep.subr.mxu0 0.0
        %450 = vmatpush1.msra.mxu0 0.0
        %451 = vmatprep.subr.mxu0 0.0
        %452 = vmatpush1.msra.mxu0 0.0
        %453 = vmatprep.subr.mxu0 0.0
        %454 = vmatpush1.msra.mxu0 0.0
        %455 = vmatprep.subr.mxu0 0.0
        %456 = vmatpush1.msra.mxu0 0.0
        %457 = vmatprep.subr.mxu0 0.0
        %458 = vmatpush1.msra.mxu0 0.0
        %459 = vmatprep.subr.mxu0 0.0
        %460 = vmatpush1.msra.mxu0 0.0
        %461 = vmatprep.subr.mxu0 0.0
        %462 = vmatpush1.msra.mxu0 0.0
        %463 = vmatprep.subr.mxu0 0.0
        %464 = vmatpush1.msra.mxu0 0.0
        %465 = vmatprep.subr.mxu0 0.0
        %466 = vmatpush1.msra.mxu0 0.0
        %467 = vmatprep.subr.mxu0 0.0
        %468 = vmatpush1.msra.mxu0 0.0
        %469 = vmatprep.subr.mxu0 0.0
        %470 = vmatpush1.msra.mxu0 0.0
        %471 = vmatprep.subr.mxu0 0.0
        %472 = vmatpush1.msra.mxu0 0.0
        %473 = vmatprep.subr.mxu0 0.0
        %474 = vmatpush1.msra.mxu0 0.0
        %475 = vmatprep.subr.mxu0 0.0
        %476 = vmatpush1.msra.mxu0 0.0
        %477 = vmatprep.subr.mxu0 0.0
        %478 = vmatpush1.msra.mxu0 0.0
        %479 = vmatprep.subr.mxu0 0.0
        %480 = vmatpush1.msra.mxu0 0.0
        %481 = vmatprep.subr.mxu0 0.0
        %482 = vmatpush1.msra.mxu0 0.0
        %483 = vmatprep.subr.mxu0 0.0
        %484 = vmatpush1.msra.mxu0 0.0
        %485 = vmatprep.subr.mxu0 0.0
        %486 = vmatpush1.msra.mxu0 0.0
        %487 = vmatprep.subr.mxu0 0.0
        %488 = vmatpush1.msra.mxu0 0.0
        %489 = vmatprep.subr.mxu0 0.0
        %490 = vmatpush1.msra.mxu0 0.0
        %491 = vmatprep.subr.mxu0 0.0
        %492 = vmatpush1.msra.mxu0 0.0
        %493 = vmatprep.subr.mxu0 0.0
        %494 = vmatpush1.msra.mxu0 0.0
        %495 = vmatprep.subr.mxu0 0.0
        %496 = vmatpush1.msra.mxu0 0.0
        %497 = vmatprep.subr.mxu0 0.0
        %498 = vmatpush1.msra.mxu0 0.0
        %499 = vmatprep.subr.mxu0 0.0
        %500 = vmatpush1.msra.mxu0 0.0
        %501 = vmatprep.subr.mxu0 0.0
        %502 = vmatpush1.msra.mxu0 0.0
        %503 = vmatprep.subr.mxu0 0.0
        %504 = vmatpush1.msra.mxu0 0.0
        %505 = vmatprep.subr.mxu0 0.0
        %506 = vmatpush1.msra.mxu0 0.0
        %507 = vmatprep.subr.mxu0 0.0
        %508 = vmatpush1.msra.mxu0 0.0
        %509 = vmatprep.subr.mxu0 0.0
        %510 = vmatpush1.msra.mxu0 0.0
        %511 = vmatprep.mubr.f32.mxu0 0.0
        %512 = vmatmul.mubr.f32.gmra.mrb[0].mxu0 %v445
        %v513 = vpop.f32.mrb[0].mxu0
        %v514 = vadd.f32 %v441, %v513
        %v515 = vpop.f32.mrb[0].mxu0
        %v516 = vadd.f32 %v441, %v515
        %517 = vdwg.mxu0
        %v518 = vmax.f32 %v430, 0.0
        %v519 = vmax.f32 %v432, 0.0
        %v520 = vld [vmem:[%s2 + $0x18] sm:$0xff]
        %v521 = vld [vmem:[%s3 + $0x18] sm:$0xff]
        %523 = vset.pattern.permute.xlu0 0
        %524 = vperm.xlu0 %523, %v521
        %v525 = vpop.permute.xlu0 %524
        %v528 = vsel %vm443, %v520, 0
        %530 = vmatprep.subr.mxu0 %v519
        %531 = vmatpush1.msra.mxu0 %v518
        %532 = vmatprep.subr.mxu0 0.0
        %533 = vmatpush1.msra.mxu0 0.0
        %534 = vmatprep.subr.mxu0 0.0
        %535 = vmatpush1.msra.mxu0 0.0
        %536 = vmatprep.subr.mxu0 0.0
        %537 = vmatpush1.msra.mxu0 0.0
        %538 = vmatprep.subr.mxu0 0.0
        %539 = vmatpush1.msra.mxu0 0.0
        %540 = vmatprep.subr.mxu0 0.0
        %541 = vmatpush1.msra.mxu0 0.0
        %542 = vmatprep.subr.mxu0 0.0
        %543 = vmatpush1.msra.mxu0 0.0
        %544 = vmatprep.subr.mxu0 0.0
        %545 = vmatpush1.msra.mxu0 0.0
        %546 = vmatprep.subr.mxu0 0.0
        %547 = vmatpush1.msra.mxu0 0.0
        %548 = vmatprep.subr.mxu0 0.0
        %549 = vmatpush1.msra.mxu0 0.0
        %550 = vmatprep.subr.mxu0 0.0
        %551 = vmatpush1.msra.mxu0 0.0
        %552 = vmatprep.subr.mxu0 0.0
        %553 = vmatpush1.msra.mxu0 0.0
        %554 = vmatprep.subr.mxu0 0.0
        %555 = vmatpush1.msra.mxu0 0.0
        %556 = vmatprep.subr.mxu0 0.0
        %557 = vmatpush1.msra.mxu0 0.0
        %558 = vmatprep.subr.mxu0 0.0
        %559 = vmatpush1.msra.mxu0 0.0
        %560 = vmatprep.subr.mxu0 0.0
        %561 = vmatpush1.msra.mxu0 0.0
        %562 = vmatprep.subr.mxu0 0.0
        %563 = vmatpush1.msra.mxu0 0.0
        %564 = vmatprep.subr.mxu0 0.0
        %565 = vmatpush1.msra.mxu0 0.0
        %566 = vmatprep.subr.mxu0 0.0
        %567 = vmatpush1.msra.mxu0 0.0
        %568 = vmatprep.subr.mxu0 0.0
        %569 = vmatpush1.msra.mxu0 0.0
        %570 = vmatprep.subr.mxu0 0.0
        %571 = vmatpush1.msra.mxu0 0.0
        %572 = vmatprep.subr.mxu0 0.0
        %573 = vmatpush1.msra.mxu0 0.0
        %574 = vmatprep.subr.mxu0 0.0
        %575 = vmatpush1.msra.mxu0 0.0
        %576 = vmatprep.subr.mxu0 0.0
        %577 = vmatpush1.msra.mxu0 0.0
        %578 = vmatprep.subr.mxu0 0.0
        %579 = vmatpush1.msra.mxu0 0.0
        %580 = vmatprep.subr.mxu0 0.0
        %581 = vmatpush1.msra.mxu0 0.0
        %582 = vmatprep.subr.mxu0 0.0
        %583 = vmatpush1.msra.mxu0 0.0
        %584 = vmatprep.subr.mxu0 0.0
        %585 = vmatpush1.msra.mxu0 0.0
        %586 = vmatprep.subr.mxu0 0.0
        %587 = vmatpush1.msra.mxu0 0.0
        %588 = vmatprep.subr.mxu0 0.0
        %589 = vmatpush1.msra.mxu0 0.0
        %590 = vmatprep.subr.mxu0 0.0
        %591 = vmatpush1.msra.mxu0 0.0
        %592 = vmatprep.subr.mxu0 0.0
        %593 = vmatpush1.msra.mxu0 0.0
        %594 = vmatprep.mubr.f32.mxu0 0.0
        %595 = vmatmul.mubr.f32.gmra.mrb[0].mxu0 %v528
        %v596 = vpop.f32.mrb[0].mxu0
        %v597 = vadd.f32 %v525, %v596
        %v598 = vpop.f32.mrb[0].mxu0
        %v599 = vadd.f32 %v525, %v598
        %600 = vdwg.mxu0
        %v601 = vadd.f32 %v514, %v597
        %v602 = vadd.f32 %v516, %v599
        %v603 = vadd.f32 %v514, %v601
        %v604 = vadd.f32 %v516, %v602
        %v605 = vld [vmem:[%s2 + $0x20] sm:$0xff]
        %v606 = vld [vmem:[%s3 + $0x20] sm:$0xff]
        %608 = vset.pattern.permute.xlu0 0
        %609 = vperm.xlu0 %608, %v606
        %v610 = vpop.permute.xlu0 %609
        %v613 = vsel %vm443, %v605, 0
        %615 = vmatprep.subr.mxu0 %v519
        %616 = vmatpush1.msra.mxu0 %v518
        %617 = vmatprep.subr.mxu0 0.0
        %618 = vmatpush1.msra.mxu0 0.0
        %619 = vmatprep.subr.mxu0 0.0
        %620 = vmatpush1.msra.mxu0 0.0
        %621 = vmatprep.subr.mxu0 0.0
        %622 = vmatpush1.msra.mxu0 0.0
        %623 = vmatprep.subr.mxu0 0.0
        %624 = vmatpush1.msra.mxu0 0.0
        %625 = vmatprep.subr.mxu0 0.0
        %626 = vmatpush1.msra.mxu0 0.0
        %627 = vmatprep.subr.mxu0 0.0
        %628 = vmatpush1.msra.mxu0 0.0
        %629 = vmatprep.subr.mxu0 0.0
        %630 = vmatpush1.msra.mxu0 0.0
        %631 = vmatprep.subr.mxu0 0.0
        %632 = vmatpush1.msra.mxu0 0.0
        %633 = vmatprep.subr.mxu0 0.0
        %634 = vmatpush1.msra.mxu0 0.0
        %635 = vmatprep.subr.mxu0 0.0
        %636 = vmatpush1.msra.mxu0 0.0
        %637 = vmatprep.subr.mxu0 0.0
        %638 = vmatpush1.msra.mxu0 0.0
        %639 = vmatprep.subr.mxu0 0.0
        %640 = vmatpush1.msra.mxu0 0.0
        %641 = vmatprep.subr.mxu0 0.0
        %642 = vmatpush1.msra.mxu0 0.0
        %643 = vmatprep.subr.mxu0 0.0
        %644 = vmatpush1.msra.mxu0 0.0
        %645 = vmatprep.subr.mxu0 0.0
        %646 = vmatpush1.msra.mxu0 0.0
        %647 = vmatprep.subr.mxu0 0.0
        %648 = vmatpush1.msra.mxu0 0.0
        %649 = vmatprep.subr.mxu0 0.0
        %650 = vmatpush1.msra.mxu0 0.0
        %651 = vmatprep.subr.mxu0 0.0
        %652 = vmatpush1.msra.mxu0 0.0
        %653 = vmatprep.subr.mxu0 0.0
        %654 = vmatpush1.msra.mxu0 0.0
        %655 = vmatprep.subr.mxu0 0.0
        %656 = vmatpush1.msra.mxu0 0.0
        %657 = vmatprep.subr.mxu0 0.0
        %658 = vmatpush1.msra.mxu0 0.0
        %659 = vmatprep.subr.mxu0 0.0
        %660 = vmatpush1.msra.mxu0 0.0
        %661 = vmatprep.subr.mxu0 0.0
        %662 = vmatpush1.msra.mxu0 0.0
        %663 = vmatprep.subr.mxu0 0.0
        %664 = vmatpush1.msra.mxu0 0.0
        %665 = vmatprep.subr.mxu0 0.0
        %666 = vmatpush1.msra.mxu0 0.0
        %667 = vmatprep.subr.mxu0 0.0
        %668 = vmatpush1.msra.mxu0 0.0
        %669 = vmatprep.subr.mxu0 0.0
        %670 = vmatpush1.msra.mxu0 0.0
        %671 = vmatprep.subr.mxu0 0.0
        %672 = vmatpush1.msra.mxu0 0.0
        %673 = vmatprep.subr.mxu0 0.0
        %674 = vmatpush1.msra.mxu0 0.0
        %675 = vmatprep.subr.mxu0 0.0
        %676 = vmatpush1.msra.mxu0 0.0
        %677 = vmatprep.subr.mxu0 0.0
        %678 = vmatpush1.msra.mxu0 0.0
        %679 = vmatprep.mubr.f32.mxu0 0.0
        %680 = vmatmul.mubr.f32.gmra.mrb[0].mxu0 %v613
        %v681 = vpop.f32.mrb[0].mxu0
        %v682 = vadd.f32 %v610, %v681
        %v683 = vpop.f32.mrb[0].mxu0
        %v684 = vadd.f32 %v610, %v683
        %685 = vdwg.mxu0
        %v686 = vmax.f32 %v601, 0.0
        %v687 = vmax.f32 %v602, 0.0
        %v688 = vld [vmem:[%s2 + $0x28] sm:$0xff]
        %v689 = vmax.f32 %v603, 0.0
        %v690 = vmax.f32 %v604, 0.0
        %v691 = vld [vmem:[%s2 + $0x30] sm:$0xff]
        %v693 = vsel %vm443, %v691, 0
        %695 = vmatprep.subr.mxu0 %v690
        %696 = vmatpush1.msra.mxu0 %v689
        %697 = vmatprep.subr.mxu0 0.0
        %698 = vmatpush1.msra.mxu0 0.0
        %699 = vmatprep.subr.mxu0 0.0
        %700 = vmatpush1.msra.mxu0 0.0
        %701 = vmatprep.subr.mxu0 0.0
        %702 = vmatpush1.msra.mxu0 0.0
        %703 = vmatprep.subr.mxu0 0.0
        %704 = vmatpush1.msra.mxu0 0.0
        %705 = vmatprep.subr.mxu0 0.0
        %706 = vmatpush1.msra.mxu0 0.0
        %707 = vmatprep.subr.mxu0 0.0
        %708 = vmatpush1.msra.mxu0 0.0
        %709 = vmatprep.subr.mxu0 0.0
        %710 = vmatpush1.msra.mxu0 0.0
        %711 = vmatprep.subr.mxu0 0.0
        %712 = vmatpush1.msra.mxu0 0.0
        %713 = vmatprep.subr.mxu0 0.0
        %714 = vmatpush1.msra.mxu0 0.0
        %715 = vmatprep.subr.mxu0 0.0
        %716 = vmatpush1.msra.mxu0 0.0
        %717 = vmatprep.subr.mxu0 0.0
        %718 = vmatpush1.msra.mxu0 0.0
        %719 = vmatprep.subr.mxu0 0.0
        %720 = vmatpush1.msra.mxu0 0.0
        %721 = vmatprep.subr.mxu0 0.0
        %722 = vmatpush1.msra.mxu0 0.0
        %723 = vmatprep.subr.mxu0 0.0
        %724 = vmatpush1.msra.mxu0 0.0
        %725 = vmatprep.subr.mxu0 0.0
        %726 = vmatpush1.msra.mxu0 0.0
        %727 = vmatprep.subr.mxu0 0.0
        %728 = vmatpush1.msra.mxu0 0.0
        %729 = vmatprep.subr.mxu0 0.0
        %730 = vmatpush1.msra.mxu0 0.0
        %731 = vmatprep.subr.mxu0 0.0
        %732 = vmatpush1.msra.mxu0 0.0
        %733 = vmatprep.subr.mxu0 0.0
        %734 = vmatpush1.msra.mxu0 0.0
        %735 = vmatprep.subr.mxu0 0.0
        %736 = vmatpush1.msra.mxu0 0.0
        %737 = vmatprep.subr.mxu0 0.0
        %738 = vmatpush1.msra.mxu0 0.0
        %739 = vmatprep.subr.mxu0 0.0
        %740 = vmatpush1.msra.mxu0 0.0
        %741 = vmatprep.subr.mxu0 0.0
        %742 = vmatpush1.msra.mxu0 0.0
        %743 = vmatprep.subr.mxu0 0.0
        %744 = vmatpush1.msra.mxu0 0.0
        %745 = vmatprep.subr.mxu0 0.0
        %746 = vmatpush1.msra.mxu0 0.0
        %747 = vmatprep.subr.mxu0 0.0
        %748 = vmatpush1.msra.mxu0 0.0
        %749 = vmatprep.subr.mxu0 0.0
        %750 = vmatpush1.msra.mxu0 0.0
        %751 = vmatprep.subr.mxu0 0.0
        %752 = vmatpush1.msra.mxu0 0.0
        %753 = vmatprep.subr.mxu0 0.0
        %754 = vmatpush1.msra.mxu0 0.0
        %755 = vmatprep.subr.mxu0 0.0
        %756 = vmatpush1.msra.mxu0 0.0
        %757 = vmatprep.subr.mxu0 0.0
        %758 = vmatpush1.msra.mxu0 0.0
        %759 = vmatprep.mubr.f32.mxu0 0.0
        %760 = vmatmul.mubr.f32.gmra.mrb[0].mxu0 %v693
        %v761 = vpop.f32.mrb[0].mxu0
        %v762 = vadd.f32 0.0, %v761
        %v763 = vpop.f32.mrb[0].mxu0
        %v764 = vadd.f32 0.0, %v763
        %765 = vdwg.mxu0
        %v767 = vsel %vm443, %v688, 0
        %769 = vmatprep.subr.mxu0 %v687
        %770 = vmatpush1.msra.mxu0 %v686
        %771 = vmatprep.subr.mxu0 0.0
        %772 = vmatpush1.msra.mxu0 0.0
        %773 = vmatprep.subr.mxu0 0.0
        %774 = vmatpush1.msra.mxu0 0.0
        %775 = vmatprep.subr.mxu0 0.0
        %776 = vmatpush1.msra.mxu0 0.0
        %777 = vmatprep.subr.mxu0 0.0
        %778 = vmatpush1.msra.mxu0 0.0
        %779 = vmatprep.subr.mxu0 0.0
        %780 = vmatpush1.msra.mxu0 0.0
        %781 = vmatprep.subr.mxu0 0.0
        %782 = vmatpush1.msra.mxu0 0.0
        %783 = vmatprep.subr.mxu0 0.0
        %784 = vmatpush1.msra.mxu0 0.0
        %785 = vmatprep.subr.mxu0 0.0
        %786 = vmatpush1.msra.mxu0 0.0
        %787 = vmatprep.subr.mxu0 0.0
        %788 = vmatpush1.msra.mxu0 0.0
        %789 = vmatprep.subr.mxu0 0.0
        %790 = vmatpush1.msra.mxu0 0.0
        %791 = vmatprep.subr.mxu0 0.0
        %792 = vmatpush1.msra.mxu0 0.0
        %793 = vmatprep.subr.mxu0 0.0
        %794 = vmatpush1.msra.mxu0 0.0
        %795 = vmatprep.subr.mxu0 0.0
        %796 = vmatpush1.msra.mxu0 0.0
        %797 = vmatprep.subr.mxu0 0.0
        %798 = vmatpush1.msra.mxu0 0.0
        %799 = vmatprep.subr.mxu0 0.0
        %800 = vmatpush1.msra.mxu0 0.0
        %801 = vmatprep.subr.mxu0 0.0
        %802 = vmatpush1.msra.mxu0 0.0
        %803 = vmatprep.subr.mxu0 0.0
        %804 = vmatpush1.msra.mxu0 0.0
        %805 = vmatprep.subr.mxu0 0.0
        %806 = vmatpush1.msra.mxu0 0.0
        %807 = vmatprep.subr.mxu0 0.0
        %808 = vmatpush1.msra.mxu0 0.0
        %809 = vmatprep.subr.mxu0 0.0
        %810 = vmatpush1.msra.mxu0 0.0
        %811 = vmatprep.subr.mxu0 0.0
        %812 = vmatpush1.msra.mxu0 0.0
        %813 = vmatprep.subr.mxu0 0.0
        %814 = vmatpush1.msra.mxu0 0.0
        %815 = vmatprep.subr.mxu0 0.0
        %816 = vmatpush1.msra.mxu0 0.0
        %817 = vmatprep.subr.mxu0 0.0
        %818 = vmatpush1.msra.mxu0 0.0
        %819 = vmatprep.subr.mxu0 0.0
        %820 = vmatpush1.msra.mxu0 0.0
        %821 = vmatprep.subr.mxu0 0.0
        %822 = vmatpush1.msra.mxu0 0.0
        %823 = vmatprep.subr.mxu0 0.0
        %824 = vmatpush1.msra.mxu0 0.0
        %825 = vmatprep.subr.mxu0 0.0
        %826 = vmatpush1.msra.mxu0 0.0
        %827 = vmatprep.subr.mxu0 0.0
        %828 = vmatpush1.msra.mxu0 0.0
        %829 = vmatprep.subr.mxu0 0.0
        %830 = vmatpush1.msra.mxu0 0.0
        %831 = vmatprep.subr.mxu0 0.0
        %832 = vmatpush1.msra.mxu0 0.0
        %833 = vmatprep.mubr.f32.mxu0 0.0
        %834 = vmatmul.mubr.f32.gmra.mrb[0].mxu0 %v767
        %v835 = vpop.f32.mrb[0].mxu0
        %v836 = vadd.f32 %v762, %v835
        %v837 = vpop.f32.mrb[0].mxu0
        %v838 = vadd.f32 %v764, %v837
        %839 = vdwg.mxu0
        %v840 = vld [vmem:[%s3 + $0x28] sm:$0xff]
        %842 = vset.pattern.permute.xlu0 0
        %843 = vperm.xlu0 %842, %v840
        %v844 = vpop.permute.xlu0 %843
        %v846 = vadd.f32 %v836, %v844
        %v847 = vadd.f32 %v838, %v844
        %v848 = vadd.f32 %v682, %v846
        %v849 = vadd.f32 %v684, %v847
        %v850 = vadd.f32 %v682, %v848
        %v851 = vadd.f32 %v684, %v849
        %v852 = vld [vmem:[%s2 + $0x38] sm:$0xff]
        %v853 = vld [vmem:[%s2 + $0x40] sm:$0xff]
        %v854 = vld [vmem:[%s2 + $0x48] sm:$0xff]
        %v855 = vld [vmem:[%s2 + $0x50] sm:$0xff]
        %v856 = vld [vmem:[%s2 + $0x58] sm:$0xff]
        %v857 = vld [vmem:[%s2 + $0x60] sm:$0xff]
        %v858 = vld [vmem:[%s2 + $0x68] sm:$0xff]
        %v859 = vld [vmem:[%s2 + $0x70] sm:$0xff]
        %v860 = vld [vmem:[%s2 + $0x78] sm:$0xff]
        %v861 = vld [vmem:[%s2 + $0x80] sm:$0xff]
        %v862 = vld [vmem:[%s2 + $0x88] sm:$0xff]
        %v863 = vld [vmem:[%s2 + $0x90] sm:$0xff]
        %v864 = vld [vmem:[%s2 + $0x98] sm:$0xff]
        %v865 = vld [vmem:[%s2 + $0xa0] sm:$0xff]
        %v866 = vld [vmem:[%s2 + $0xa8] sm:$0xff]
        %v867 = vld [vmem:[%s2 + $0xb0] sm:$0xff]
        %v869 = vsel %vm443, %v860, 0
        %v872 = vsel %vm443, %v861, 0
        %v875 = vsel %vm443, %v862, 0
        %v878 = vsel %vm443, %v863, 0
        %v881 = vsel %vm443, %v864, 0
        %v884 = vsel %vm443, %v865, 0
        %v887 = vsel %vm443, %v866, 0
        %v890 = vsel %vm443, %v867, 0
        %892 = vmatprep.subr.mxu0 %v851
        %893 = vmatpush1.msra.mxu0 %v850
        %894 = vmatprep.subr.mxu0 0.0
        %895 = vmatpush1.msra.mxu0 0.0
        %896 = vmatprep.subr.mxu0 0.0
        %897 = vmatpush1.msra.mxu0 0.0
        %898 = vmatprep.subr.mxu0 0.0
        %899 = vmatpush1.msra.mxu0 0.0
        %900 = vmatprep.subr.mxu0 0.0
        %901 = vmatpush1.msra.mxu0 0.0
        %902 = vmatprep.subr.mxu0 0.0
        %903 = vmatpush1.msra.mxu0 0.0
        %904 = vmatprep.subr.mxu0 0.0
        %905 = vmatpush1.msra.mxu0 0.0
        %906 = vmatprep.subr.mxu0 0.0
        %907 = vmatpush1.msra.mxu0 0.0
        %908 = vmatprep.subr.mxu0 0.0
        %909 = vmatpush1.msra.mxu0 0.0
        %910 = vmatprep.subr.mxu0 0.0
        %911 = vmatpush1.msra.mxu0 0.0
        %912 = vmatprep.subr.mxu0 0.0
        %913 = vmatpush1.msra.mxu0 0.0
        %914 = vmatprep.subr.mxu0 0.0
        %915 = vmatpush1.msra.mxu0 0.0
        %916 = vmatprep.subr.mxu0 0.0
        %917 = vmatpush1.msra.mxu0 0.0
        %918 = vmatprep.subr.mxu0 0.0
        %919 = vmatpush1.msra.mxu0 0.0
        %920 = vmatprep.subr.mxu0 0.0
        %921 = vmatpush1.msra.mxu0 0.0
        %922 = vmatprep.subr.mxu0 0.0
        %923 = vmatpush1.msra.mxu0 0.0
        %924 = vmatprep.subr.mxu0 0.0
        %925 = vmatpush1.msra.mxu0 0.0
        %926 = vmatprep.subr.mxu0 0.0
        %927 = vmatpush1.msra.mxu0 0.0
        %928 = vmatprep.subr.mxu0 0.0
        %929 = vmatpush1.msra.mxu0 0.0
        %930 = vmatprep.subr.mxu0 0.0
        %931 = vmatpush1.msra.mxu0 0.0
        %932 = vmatprep.subr.mxu0 0.0
        %933 = vmatpush1.msra.mxu0 0.0
        %934 = vmatprep.subr.mxu0 0.0
        %935 = vmatpush1.msra.mxu0 0.0
        %936 = vmatprep.subr.mxu0 0.0
        %937 = vmatpush1.msra.mxu0 0.0
        %938 = vmatprep.subr.mxu0 0.0
        %939 = vmatpush1.msra.mxu0 0.0
        %940 = vmatprep.subr.mxu0 0.0
        %941 = vmatpush1.msra.mxu0 0.0
        %942 = vmatprep.subr.mxu0 0.0
        %943 = vmatpush1.msra.mxu0 0.0
        %944 = vmatprep.subr.mxu0 0.0
        %945 = vmatpush1.msra.mxu0 0.0
        %946 = vmatprep.subr.mxu0 0.0
        %947 = vmatpush1.msra.mxu0 0.0
        %948 = vmatprep.subr.mxu0 0.0
        %949 = vmatpush1.msra.mxu0 0.0
        %950 = vmatprep.subr.mxu0 0.0
        %951 = vmatpush1.msra.mxu0 0.0
        %952 = vmatprep.subr.mxu0 0.0
        %953 = vmatpush1.msra.mxu0 0.0
        %954 = vmatprep.subr.mxu0 0.0
        %955 = vmatpush1.msra.mxu0 0.0
        %956 = vmatprep.mubr.f32.mxu0 0.0
        %957 = vmatmul.mubr.f32.gmra.mrb[0].mxu0 %v869
        %v958 = vpop.f32.mrb[0].mxu0
        %v959 = vadd.f32 0.0, %v958
        %v960 = vpop.f32.mrb[0].mxu0
        %v961 = vadd.f32 0.0, %v960
        %962 = vmatprep.mubr.f32.mxu0 0.0
        %963 = vmatmul.mubr.f32.gmra.mrb[0].mxu0 %v872
        %v964 = vpop.f32.mrb[0].mxu0
        %v965 = vadd.f32 0.0, %v964
        %v966 = vpop.f32.mrb[0].mxu0
        %v967 = vadd.f32 0.0, %v966
        %968 = vmatprep.mubr.f32.mxu0 0.0
        %969 = vmatmul.mubr.f32.gmra.mrb[0].mxu0 %v875
        %v970 = vpop.f32.mrb[0].mxu0
        %v971 = vadd.f32 0.0, %v970
        %v972 = vpop.f32.mrb[0].mxu0
        %v973 = vadd.f32 0.0, %v972
        %974 = vmatprep.mubr.f32.mxu0 0.0
        %975 = vmatmul.mubr.f32.gmra.mrb[0].mxu0 %v878
        %v976 = vpop.f32.mrb[0].mxu0
        %v977 = vadd.f32 0.0, %v976
        %v978 = vpop.f32.mrb[0].mxu0
        %v979 = vadd.f32 0.0, %v978
        %980 = vmatprep.mubr.f32.mxu0 0.0
        %981 = vmatmul.mubr.f32.gmra.mrb[0].mxu0 %v881
        %v982 = vpop.f32.mrb[0].mxu0
        %v983 = vadd.f32 0.0, %v982
        %v984 = vpop.f32.mrb[0].mxu0
        %v985 = vadd.f32 0.0, %v984
        %986 = vmatprep.mubr.f32.mxu0 0.0
        %987 = vmatmul.mubr.f32.gmra.mrb[0].mxu0 %v884
        %v988 = vpop.f32.mrb[0].mxu0
        %v989 = vadd.f32 0.0, %v988
        %v990 = vpop.f32.mrb[0].mxu0
        %v991 = vadd.f32 0.0, %v990
        %992 = vmatprep.mubr.f32.mxu0 0.0
        %993 = vmatmul.mubr.f32.gmra.mrb[0].mxu0 %v887
        %v994 = vpop.f32.mrb[0].mxu0
        %v995 = vadd.f32 0.0, %v994
        %v996 = vpop.f32.mrb[0].mxu0
        %v997 = vadd.f32 0.0, %v996
        %998 = vmatprep.mubr.f32.mxu0 0.0
        %999 = vmatmul.mubr.f32.gmra.mrb[0].mxu0 %v890
        %v1000 = vpop.f32.mrb[0].mxu0
        %v1001 = vadd.f32 0.0, %v1000
        %v1002 = vpop.f32.mrb[0].mxu0
        %v1003 = vadd.f32 0.0, %v1002
        %1004 = vdwg.mxu0
        %v1006 = vsel %vm443, %v852, 0
        %v1009 = vsel %vm443, %v853, 0
        %v1012 = vsel %vm443, %v854, 0
        %v1015 = vsel %vm443, %v855, 0
        %v1018 = vsel %vm443, %v856, 0
        %v1021 = vsel %vm443, %v857, 0
        %v1024 = vsel %vm443, %v858, 0
        %v1027 = vsel %vm443, %v859, 0
        %1029 = vmatprep.subr.mxu0 %v849
        %1030 = vmatpush1.msra.mxu0 %v848
        %1031 = vmatprep.subr.mxu0 0.0
        %1032 = vmatpush1.msra.mxu0 0.0
        %1033 = vmatprep.subr.mxu0 0.0
        %1034 = vmatpush1.msra.mxu0 0.0
        %1035 = vmatprep.subr.mxu0 0.0
        %1036 = vmatpush1.msra.mxu0 0.0
        %1037 = vmatprep.subr.mxu0 0.0
        %1038 = vmatpush1.msra.mxu0 0.0
        %1039 = vmatprep.subr.mxu0 0.0
        %1040 = vmatpush1.msra.mxu0 0.0
        %1041 = vmatprep.subr.mxu0 0.0
        %1042 = vmatpush1.msra.mxu0 0.0
        %1043 = vmatprep.subr.mxu0 0.0
        %1044 = vmatpush1.msra.mxu0 0.0
        %1045 = vmatprep.subr.mxu0 0.0
        %1046 = vmatpush1.msra.mxu0 0.0
        %1047 = vmatprep.subr.mxu0 0.0
        %1048 = vmatpush1.msra.mxu0 0.0
        %1049 = vmatprep.subr.mxu0 0.0
        %1050 = vmatpush1.msra.mxu0 0.0
        %1051 = vmatprep.subr.mxu0 0.0
        %1052 = vmatpush1.msra.mxu0 0.0
        %1053 = vmatprep.subr.mxu0 0.0
        %1054 = vmatpush1.msra.mxu0 0.0
        %1055 = vmatprep.subr.mxu0 0.0
        %1056 = vmatpush1.msra.mxu0 0.0
        %1057 = vmatprep.subr.mxu0 0.0
        %1058 = vmatpush1.msra.mxu0 0.0
        %1059 = vmatprep.subr.mxu0 0.0
        %1060 = vmatpush1.msra.mxu0 0.0
        %1061 = vmatprep.subr.mxu0 0.0
        %1062 = vmatpush1.msra.mxu0 0.0
        %1063 = vmatprep.subr.mxu0 0.0
        %1064 = vmatpush1.msra.mxu0 0.0
        %1065 = vmatprep.subr.mxu0 0.0
        %1066 = vmatpush1.msra.mxu0 0.0
        %1067 = vmatprep.subr.mxu0 0.0
        %1068 = vmatpush1.msra.mxu0 0.0
        %1069 = vmatprep.subr.mxu0 0.0
        %1070 = vmatpush1.msra.mxu0 0.0
        %1071 = vmatprep.subr.mxu0 0.0
        %1072 = vmatpush1.msra.mxu0 0.0
        %1073 = vmatprep.subr.mxu0 0.0
        %1074 = vmatpush1.msra.mxu0 0.0
        %1075 = vmatprep.subr.mxu0 0.0
        %1076 = vmatpush1.msra.mxu0 0.0
        %1077 = vmatprep.subr.mxu0 0.0
        %1078 = vmatpush1.msra.mxu0 0.0
        %1079 = vmatprep.subr.mxu0 0.0
        %1080 = vmatpush1.msra.mxu0 0.0
        %1081 = vmatprep.subr.mxu0 0.0
        %1082 = vmatpush1.msra.mxu0 0.0
        %1083 = vmatprep.subr.mxu0 0.0
        %1084 = vmatpush1.msra.mxu0 0.0
        %1085 = vmatprep.subr.mxu0 0.0
        %1086 = vmatpush1.msra.mxu0 0.0
        %1087 = vmatprep.subr.mxu0 0.0
        %1088 = vmatpush1.msra.mxu0 0.0
        %1089 = vmatprep.subr.mxu0 0.0
        %1090 = vmatpush1.msra.mxu0 0.0
        %1091 = vmatprep.subr.mxu0 0.0
        %1092 = vmatpush1.msra.mxu0 0.0
        %1093 = vmatprep.mubr.f32.mxu0 0.0
        %1094 = vmatmul.mubr.f32.gmra.mrb[0].mxu0 %v1006
        %v1095 = vpop.f32.mrb[0].mxu0
        %v1096 = vadd.f32 %v959, %v1095
        %v1097 = vpop.f32.mrb[0].mxu0
        %v1098 = vadd.f32 %v961, %v1097
        %1099 = vmatprep.mubr.f32.mxu0 0.0
        %1100 = vmatmul.mubr.f32.gmra.mrb[0].mxu0 %v1009
        %v1101 = vpop.f32.mrb[0].mxu0
        %v1102 = vadd.f32 %v965, %v1101
        %v1103 = vpop.f32.mrb[0].mxu0
        %v1104 = vadd.f32 %v967, %v1103
        %1105 = vmatprep.mubr.f32.mxu0 0.0
        %1106 = vmatmul.mubr.f32.gmra.mrb[0].mxu0 %v1012
        %v1107 = vpop.f32.mrb[0].mxu0
        %v1108 = vadd.f32 %v971, %v1107
        %v1109 = vpop.f32.mrb[0].mxu0
        %v1110 = vadd.f32 %v973, %v1109
        %1111 = vmatprep.mubr.f32.mxu0 0.0
        %1112 = vmatmul.mubr.f32.gmra.mrb[0].mxu0 %v1015
        %v1113 = vpop.f32.mrb[0].mxu0
        %v1114 = vadd.f32 %v977, %v1113
        %v1115 = vpop.f32.mrb[0].mxu0
        %v1116 = vadd.f32 %v979, %v1115
        %1117 = vmatprep.mubr.f32.mxu0 0.0
        %1118 = vmatmul.mubr.f32.gmra.mrb[0].mxu0 %v1018
        %v1119 = vpop.f32.mrb[0].mxu0
        %v1120 = vadd.f32 %v983, %v1119
        %v1121 = vpop.f32.mrb[0].mxu0
        %v1122 = vadd.f32 %v985, %v1121
        %1123 = vmatprep.mubr.f32.mxu0 0.0
        %1124 = vmatmul.mubr.f32.gmra.mrb[0].mxu0 %v1021
        %v1125 = vpop.f32.mrb[0].mxu0
        %v1126 = vadd.f32 %v989, %v1125
        %v1127 = vpop.f32.mrb[0].mxu0
        %v1128 = vadd.f32 %v991, %v1127
        %1129 = vmatprep.mubr.f32.mxu0 0.0
        %1130 = vmatmul.mubr.f32.gmra.mrb[0].mxu0 %v1024
        %v1131 = vpop.f32.mrb[0].mxu0
        %v1132 = vadd.f32 %v995, %v1131
        %v1133 = vpop.f32.mrb[0].mxu0
        %v1134 = vadd.f32 %v997, %v1133
        %1135 = vmatprep.mubr.f32.mxu0 0.0
        %1136 = vmatmul.mubr.f32.gmra.mrb[0].mxu0 %v1027
        %v1137 = vpop.f32.mrb[0].mxu0
        %v1138 = vadd.f32 %v1001, %v1137
        %v1139 = vpop.f32.mrb[0].mxu0
        %v1140 = vadd.f32 %v1003, %v1139
        %1141 = vdwg.mxu0
        %v1142 = vld [vmem:[%s3 + $0x30] sm:$0xff]
        %v1143 = vld [vmem:[%s3 + $0x38] sm:$0xff]
        %v1144 = vld [vmem:[%s3 + $0x40] sm:$0xff]
        %v1145 = vld [vmem:[%s3 + $0x48] sm:$0xff]
        %v1146 = vld [vmem:[%s3 + $0x50] sm:$0xff]
        %v1147 = vld [vmem:[%s3 + $0x58] sm:$0xff]
        %v1148 = vld [vmem:[%s3 + $0x60] sm:$0xff]
        %v1149 = vld [vmem:[%s3 + $0x68] sm:$0xff]
        %1151 = vset.pattern.permute.xlu0 0
        %1152 = vperm.xlu0 %1151, %v1142
        %v1153 = vpop.permute.xlu0 %1152
        %1156 = vset.pattern.permute.xlu0 0
        %1157 = vperm.xlu0 %1156, %v1143
        %v1158 = vpop.permute.xlu0 %1157
        %1161 = vset.pattern.permute.xlu0 0
        %1162 = vperm.xlu0 %1161, %v1144
        %v1163 = vpop.permute.xlu0 %1162
        %1166 = vset.pattern.permute.xlu0 0
        %1167 = vperm.xlu0 %1166, %v1145
        %v1168 = vpop.permute.xlu0 %1167
        %1171 = vset.pattern.permute.xlu0 0
        %1172 = vperm.xlu0 %1171, %v1146
        %v1173 = vpop.permute.xlu0 %1172
        %1176 = vset.pattern.permute.xlu0 0
        %1177 = vperm.xlu0 %1176, %v1147
        %v1178 = vpop.permute.xlu0 %1177
        %1181 = vset.pattern.permute.xlu0 0
        %1182 = vperm.xlu0 %1181, %v1148
        %v1183 = vpop.permute.xlu0 %1182
        %1186 = vset.pattern.permute.xlu0 0
        %1187 = vperm.xlu0 %1186, %v1149
        %v1188 = vpop.permute.xlu0 %1187
        %v1190 = vadd.f32 %v1096, %v1153
        %v1191 = vadd.f32 %v1098, %v1153
        %v1192 = vadd.f32 %v1102, %v1158
        %v1193 = vadd.f32 %v1104, %v1158
        %v1194 = vadd.f32 %v1108, %v1163
        %v1195 = vadd.f32 %v1110, %v1163
        %v1196 = vadd.f32 %v1114, %v1168
        %v1197 = vadd.f32 %v1116, %v1168
        %v1198 = vadd.f32 %v1120, %v1173
        %v1199 = vadd.f32 %v1122, %v1173
        %v1200 = vadd.f32 %v1126, %v1178
        %v1201 = vadd.f32 %v1128, %v1178
        %v1202 = vadd.f32 %v1132, %v1183
        %v1203 = vadd.f32 %v1134, %v1183
        %v1204 = vadd.f32 %v1138, %v1188
        %v1205 = vadd.f32 %v1140, %v1188
        %1206 = vst [vmem:[%s241] sm:$0xff] %v1190
        %1207 = vst [vmem:[%s241 + $0x8] sm:$0xff] %v1191
        %1208 = vst [vmem:[%s241 + $0x10] sm:$0xff] %v1192
        %1209 = vst [vmem:[%s241 + $0x18] sm:$0xff] %v1193
        %1210 = vst [vmem:[%s241 + $0x20] sm:$0xff] %v1194
        %1211 = vst [vmem:[%s241 + $0x28] sm:$0xff] %v1195
        %1212 = vst [vmem:[%s241 + $0x30] sm:$0xff] %v1196
        %1213 = vst [vmem:[%s241 + $0x38] sm:$0xff] %v1197
        %1214 = vst [vmem:[%s241 + $0x40] sm:$0xff] %v1198
        %1215 = vst [vmem:[%s241 + $0x48] sm:$0xff] %v1199
        %1216 = vst [vmem:[%s241 + $0x50] sm:$0xff] %v1200
        %1217 = vst [vmem:[%s241 + $0x58] sm:$0xff] %v1201
        %1218 = vst [vmem:[%s241 + $0x60] sm:$0xff] %v1202
        %1219 = vst [vmem:[%s241 + $0x68] sm:$0xff] %v1203
        %1220 = vst [vmem:[%s241 + $0x70] sm:$0xff] %v1204
        %1221 = vst [vmem:[%s241 + $0x78] sm:$0xff] %v1205
        %s1222 = sand.u32 %s138, 1
        %s1223 = scalar_lea.sflag [#allocation3], %s1222
        %s1224 = sand.u32 %s138, 1
        %s1225 = smul.addr %s1224, 128
        %s1226 = scalar_lea.vmem [#allocation2], %s1225
        // Predicated region
        $region37: #{tpu_custom_call.1} parent=35 // pred_check
          %p1227 = pneg %p148
        $region38: #{tpu_custom_call.1} parent=35 // pred_check_branch
          %1229 = sbr.rel (%p1227) target = $region40
        $region39: #{tpu_custom_call.1} parent=35 // pred_region
          %s1230 = smul.u32 2, %s23
          %s1232 = ssub.s32 2048, 2048
          %1233 = vsyncadd %s1223, %s1232
          %s1234 = smul.addr %s22, 16
          %s1235 = sadd.s32 %s1230, %s1234
          %s1236 = smul.addr %s1235, 128
          %s1237 = scalar_lea.hbm %s4, %s1236
          %s1238 = sshll.u32 %s1226, 4
          %s1239 = int_to_ptr.vmem [resolvable:$true] %s1238
          %1244 = dma.vmem_to_hbm [thread:$0]  %s1239, 2048, %s1237, %s1223, 256, 256, 16
        $region40: #{tpu_custom_call.1} parent=35 // pred_fallthru
          _
      $region36: #{tpu_custom_call.1} parent=5 // pred_fallthru
        _
      %p1245 = scmp.le.s32.totalorder 2, %s13
      // Predicated region
      $region41: #{tpu_custom_call.1} parent=5 // pred_check
        %p1246 = pneg %p1245
      $region42: #{tpu_custom_call.1} parent=5 // pred_check_branch
        %1248 = sbr.rel (%p1246) target = $region44
      $region43: #{tpu_custom_call.1} parent=5 // pred_region
        %s1249 = ssub.s32 %s13, 2
        // Predicated region
        $region45: #{tpu_custom_call.1} parent=43 // pred_check
          %p1250 = pneg %p154
        $region46: #{tpu_custom_call.1} parent=43 // pred_check_branch
          %1252 = sbr.rel (%p1250) target = $region48
        $region47: #{tpu_custom_call.1} parent=43 // pred_region
          %s1253 = sand.u32 %s139, 1
          %s1254 = scalar_lea.sflag [#allocation3], %s1253
          %s1255 = sand.u32 %s139, 1
          %s1256 = smul.addr %s1255, 128
          %s1257 = scalar_lea.vmem [#allocation2], %s1256
          %1258 = dma.done %s1254, 2048
        $region48: #{tpu_custom_call.1} parent=43 // pred_fallthru
          _
      $region44: #{tpu_custom_call.1} parent=5 // pred_fallthru
        _
    $region6: #{tpu_custom_call.1} parent=1 // loop_footer
      %s17 = sadd.s32 1, %s13
    $region7: #{tpu_custom_call.1} parent=1 // loop_footer_branch
      %12 = sbr.rel target = $region3
    $region8: #{tpu_custom_call.1} parent=1 // loop_exit
      _
    %1259 = vsyncpa [#allocation3], 1
    %s1260 = scalar_lea.sflag [#allocation3], 1
    %1261 = vsyncpa %s1260, 1

</llo_original>
